<compile_context>
chip_gen: v7x
topology: tpu7x:2x2x1
jax: 0.10.0
libtpu: 0.0.40
codegen_flags: <defaults>
</compile_context>

<pallas_src>
import jax
import jax.numpy as jnp
from jax.experimental import pallas as pl
from jax.experimental.pallas import tpu as pltpu

EPS = 1e-5


def _conv_stats_kernel(x_ref, w_ref, conv_ref, stats_ref):
    """One grid step: 3x3 conv (3 banded matmuls) over IB images + BN partial stats.

    x_ref:     (IB, Hp, Wp*Cin)    lane-dense, spatially padded input images
    w_ref:     (3, Wp*Cin, W*Cout) banded conv weights (one band per kh)
    conv_ref:  (IB, H, W*Cout)     f32 conv output slab (lane-dense)
    stats_ref: (1, 2, W*Cout)      per-step [sum, sum-of-squares] partials
    """
    ib, hp, _ = x_ref.shape
    h = hp - 2
    wco = conv_ref.shape[-1]

    ssum = jnp.zeros((1, wco), jnp.float32)
    ssq = jnp.zeros((1, wco), jnp.float32)
    for b in range(ib):                       # static unroll; IB is small
        x2d = x_ref[b]                        # (Hp, Wp*Cin)
        acc = jnp.zeros((h, wco), jnp.float32)
        for kh in range(3):                   # kw shift + Cin->Cout live in the band
            acc = acc + jnp.dot(x2d[kh:kh + h, :], w_ref[kh],
                                preferred_element_type=jnp.float32)
        # NOTE: the Conv2d bias is intentionally NOT added here; under training-mode
        # BatchNorm a per-channel constant cancels against the batch mean.
        conv_ref[b] = acc.astype(conv_ref.dtype)
        ssum = ssum + jnp.sum(acc, axis=0, keepdims=True)      # sublane reduce only
        ssq = ssq + jnp.sum(acc * acc, axis=0, keepdims=True)
    stats_ref[0] = jnp.concatenate([ssum, ssq], axis=0)


def conv_bn_relu(x_nchw, weight_oihw, bias, gamma, beta, *, images_per_block=1):
    """Forward of the PyTorch conv_bn_relu module. Input/output are NCHW."""
    del bias  # cancels exactly under training-mode BatchNorm (see kernel note)
    N, Cin, H, W = x_nchw.shape
    Cout = weight_oihw.shape[0]
    out_dtype = x_nchw.dtype

    Hp, Wp = H + 2, W + 2
    WpC = Wp * Cin            # lane-dense padded row width (72 for the demo shape)
    WCo = W * Cout            # lane-dense output row width (128 for the demo shape)

    IB = images_per_block if (images_per_block > 0 and N % images_per_block == 0) else 1
    T = N // IB               # grid steps; keep >= 2 so both v7x cores get work
    # TODO(synk): for production shapes raise IB (or tile H with a halo index_map) so
    # each grid step moves >= 0.5 MiB and the per-kh matmul M dim reaches 256+.

    # --- input prep (single fused XLA pass): NCHW -> padded lane-dense (N, Hp, Wp*Cin)
    x_nhwc = jnp.transpose(x_nchw, (0, 2, 3, 1)).astype(jnp.float32)
    xp = jnp.pad(x_nhwc, ((0, 0), (1, 1), (1, 1), (0, 0)))
    x2d = xp.reshape(N, Hp, WpC)

    # --- banded weights: fold the kw shift and Cin->Cout contraction into K, per kh.
    # wband[kh, p*Cin + ci, w*Cout + co] = weight[co, ci, kh, p - w]  (0 <= p-w < 3)
    w_hwio = jnp.transpose(weight_oihw, (2, 3, 1, 0)).astype(jnp.float32)  # (3,3,Cin,Cout)
    sel = (jnp.arange(Wp)[:, None, None]
           == jnp.arange(W)[None, :, None] + jnp.arange(3)[None, None, :])
    wband = jnp.einsum('pwk,hkic->hpiwc', sel.astype(jnp.float32), w_hwio)
    wband = wband.reshape(3, WpC, WCo)

    cparams = pltpu.CompilerParams(
        dimension_semantics=("parallel",),     # independent images -> core sharding
        vmem_limit_bytes=32 * 1024 * 1024,     # fits scoped VMEM on v5e/v6e/v7x
    )

    # ---- Single Pallas pass: conv slab + per-step BN partial statistics ----
    conv_slab, stats = pl.pallas_call(
        _conv_stats_kernel,
        grid=(T,),
        in_specs=[
            pl.BlockSpec((IB, Hp, WpC), lambda t: (t, 0, 0)),
            pl.BlockSpec((3, WpC, WCo), lambda t: (0, 0, 0)),
        ],
        out_specs=(
            pl.BlockSpec((IB, H, WCo), lambda t: (t, 0, 0)),
            pl.BlockSpec((1, 2, WCo), lambda t: (t, 0, 0)),
        ),
        out_shape=(
            # f32 slab for tight numerical parity with the f32 PyTorch module; in
            # production a bf16 slab (f32 accumulate in-kernel) halves its HBM traffic.
            jax.ShapeDtypeStruct((N, H, WCo), jnp.float32),
            jax.ShapeDtypeStruct((T, 2, WCo), jnp.float32),
        ),
        compiler_params=cparams,
    )(x2d, wband)

    # ---- XLA epilogue: fold full-batch BN stats + affine into (scale, shift); the
    # FMA + ReLU fuse with the unavoidable NHWC->NCHW repack (no second Pallas pass).
    count = jnp.float32(N * H * W)
    tot = jnp.sum(stats, axis=0).reshape(2, W, Cout).sum(axis=1)   # (2, Cout)
    mean = tot[0] / count
    var = tot[1] / count - mean * mean      # biased variance (training-mode BN)
    # TODO(synk): switch to centered per-step sums if real activations make the
    # E[x^2] - E[x]^2 form cancellation-prone.
    inv = jax.lax.rsqrt(var + EPS)
    scale = gamma.astype(jnp.float32) * inv
    shift = beta.astype(jnp.float32) - mean * scale

    y = conv_slab.reshape(N, H, W, Cout)
    out_nhwc = jnp.maximum(y * scale + shift, 0.0).astype(out_dtype)
    return jnp.transpose(out_nhwc, (0, 3, 1, 2))


def conv_bn_relu_ref(x_nchw, weight_oihw, bias, gamma, beta):
    """Pure-JAX reference (NCHW, same training-mode BN semantics)."""
    y = jax.lax.conv_general_dilated(
        x_nchw.astype(jnp.float32), weight_oihw.astype(jnp.float32),
        window_strides=(1, 1), padding=((1, 1), (1, 1)),
        dimension_numbers=("NCHW", "OIHW", "NCHW"),
        precision=jax.lax.Precision.HIGHEST)
    y = y + bias.reshape(1, -1, 1, 1)
    mean = jnp.mean(y, axis=(0, 2, 3), keepdims=True)
    var = jnp.mean((y - mean) ** 2, axis=(0, 2, 3), keepdims=True)
    y = (y - mean) * jax.lax.rsqrt(var + EPS)
    y = y * gamma.reshape(1, -1, 1, 1) + beta.reshape(1, -1, 1, 1)
    return jnp.maximum(y, 0.0).astype(x_nchw.dtype)


if __name__ == "__main__":
    N, Cin, H, W = 2, 4, 16, 16
    Cout = 8

    key = jax.random.PRNGKey(0)
    kx, kw, kb, kg, kbe = jax.random.split(key, 5)

    x = jax.random.normal(kx, (N, Cin, H, W), jnp.float32)
    # Shapes match nn.Conv2d(Cin, Cout, 3, padding=1) and nn.BatchNorm2d(Cout);
    # gamma/beta perturbed from their (1, 0) defaults to exercise the affine path.
    weight = jax.random.normal(kw, (Cout, Cin, 3, 3), jnp.float32) * 0.1
    bias = jax.random.normal(kb, (Cout,), jnp.float32) * 0.1
    gamma = 1.0 + 0.1 * jax.random.normal(kg, (Cout,), jnp.float32)
    beta = 0.1 * jax.random.normal(kbe, (Cout,), jnp.float32)

    out = conv_bn_relu(x, weight, bias, gamma, beta)
    out = jax.block_until_ready(out)

    ref = conv_bn_relu_ref(x, weight, bias, gamma, beta)
    assert out.shape == (N, Cout, H, W)
    max_err = float(jnp.max(jnp.abs(out - ref)))
    assert jnp.allclose(out, ref, atol=1e-2, rtol=1e-2), f"mismatch vs ref (max abs err {max_err})"

    print("KERNEL_OK")
</pallas_src>

<mosaic_0001>
module attributes {stable_mosaic.version = 11 : i64} {
  func.func @_conv_stats_kernel(%arg0: i32, %arg1: memref<1x18x72xf32, #tpu.memory_space<vmem>>, %arg2: memref<3x72x128xf32, #tpu.memory_space<vmem>>, %arg3: memref<1x16x128xf32, #tpu.memory_space<vmem>>, %arg4: memref<1x2x128xf32, #tpu.memory_space<vmem>>) attributes {dimension_semantics = [#tpu.dimension_semantics<parallel>], iteration_bounds = array<i64: 2>, scalar_prefetch = 0 : i64, scratch_operands = 0 : i64, tpu.core_type = #tpu.core_type<tc>, window_params = [{transform_indices = @transform_0, window_bounds = array<i64: 1, 18, 72>}, {pipeline_mode = #tpu.pipeline_mode<synchronous>, transform_indices = @transform_1, window_bounds = array<i64: 3, 72, 128>}, {transform_indices = @transform_2, window_bounds = array<i64: 1, 16, 128>}, {transform_indices = @transform_3, window_bounds = array<i64: 1, 2, 128>}]} {
    %cst = arith.constant 0.000000e+00 : f32
    %0 = vector.broadcast %cst : f32 to vector<1x128xf32>
    %cst_0 = arith.constant 0.000000e+00 : f32
    %1 = vector.broadcast %cst_0 : f32 to vector<1x128xf32>
    %c0 = arith.constant 0 : index
    %c0_1 = arith.constant 0 : index
    %c0_2 = arith.constant 0 : index
    %2 = vector.load %arg1[%c0, %c0_1, %c0_2] : memref<1x18x72xf32, #tpu.memory_space<vmem>>, vector<1x18x72xf32>
    %3 = vector.shape_cast %2 : vector<1x18x72xf32> to vector<18x72xf32>
    %cst_3 = arith.constant 0.000000e+00 : f32
    %4 = vector.broadcast %cst_3 : f32 to vector<16x128xf32>
    %5 = vector.extract_strided_slice %3 {offsets = [0, 0], sizes = [16, 72], strides = [1, 1]} : vector<18x72xf32> to vector<16x72xf32>
    %c0_4 = arith.constant 0 : index
    %c0_5 = arith.constant 0 : index
    %c0_6 = arith.constant 0 : index
    %6 = vector.load %arg2[%c0_4, %c0_5, %c0_6] : memref<3x72x128xf32, #tpu.memory_space<vmem>>, vector<1x72x128xf32>
    %7 = vector.shape_cast %6 : vector<1x72x128xf32> to vector<72x128xf32>
    %cst_7 = arith.constant dense<0.000000e+00> : vector<16x128xf32>
    %8 = tpu.matmul %5, %7, %cst_7 {dimension_numbers = #tpu.dot_dimension_numbers<[1], [0], [0], [1], [0, 0, 1, 1], [], []>} : vector<16x72xf32>, vector<72x128xf32>, vector<16x128xf32> -> vector<16x128xf32>
    %9 = arith.addf %4, %8 : vector<16x128xf32>
    %10 = vector.extract_strided_slice %3 {offsets = [1, 0], sizes = [16, 72], strides = [1, 1]} : vector<18x72xf32> to vector<16x72xf32>
    %c1 = arith.constant 1 : index
    %c0_8 = arith.constant 0 : index
    %c0_9 = arith.constant 0 : index
    %11 = vector.load %arg2[%c1, %c0_8, %c0_9] : memref<3x72x128xf32, #tpu.memory_space<vmem>>, vector<1x72x128xf32>
    %12 = vector.shape_cast %11 : vector<1x72x128xf32> to vector<72x128xf32>
    %cst_10 = arith.constant dense<0.000000e+00> : vector<16x128xf32>
    %13 = tpu.matmul %10, %12, %cst_10 {dimension_numbers = #tpu.dot_dimension_numbers<[1], [0], [0], [1], [0, 0, 1, 1], [], []>} : vector<16x72xf32>, vector<72x128xf32>, vector<16x128xf32> -> vector<16x128xf32>
    %14 = arith.addf %9, %13 : vector<16x128xf32>
    %15 = vector.extract_strided_slice %3 {offsets = [2, 0], sizes = [16, 72], strides = [1, 1]} : vector<18x72xf32> to vector<16x72xf32>
    %c2 = arith.constant 2 : index
    %c0_11 = arith.constant 0 : index
    %c0_12 = arith.constant 0 : index
    %16 = vector.load %arg2[%c2, %c0_11, %c0_12] : memref<3x72x128xf32, #tpu.memory_space<vmem>>, vector<1x72x128xf32>
    %17 = vector.shape_cast %16 : vector<1x72x128xf32> to vector<72x128xf32>
    %cst_13 = arith.constant dense<0.000000e+00> : vector<16x128xf32>
    %18 = tpu.matmul %15, %17, %cst_13 {dimension_numbers = #tpu.dot_dimension_numbers<[1], [0], [0], [1], [0, 0, 1, 1], [], []>} : vector<16x72xf32>, vector<72x128xf32>, vector<16x128xf32> -> vector<16x128xf32>
    %19 = arith.addf %14, %18 : vector<16x128xf32>
    %c0_14 = arith.constant 0 : index
    %c0_15 = arith.constant 0 : index
    %c0_16 = arith.constant 0 : index
    %20 = vector.load %arg3[%c0_14, %c0_15, %c0_16] : memref<1x16x128xf32, #tpu.memory_space<vmem>>, vector<1x16x128xf32>
    %21 = vector.shape_cast %20 : vector<1x16x128xf32> to vector<16x128xf32>
    %22 = vector.shape_cast %19 : vector<16x128xf32> to vector<1x16x128xf32>
    tpu.vector_store %arg3[%c0_14, %c0_15, %c0_16], %22 {strides = array<i32>} : memref<1x16x128xf32, #tpu.memory_space<vmem>>, vector<1x16x128xf32>,
    %cst_17 = arith.constant dense<0.000000e+00> : vector<128xf32>
    %23 = vector.multi_reduction <add>, %19, %cst_17 [0] : vector<16x128xf32> to vector<128xf32>
    %24 = vector.shape_cast %23 : vector<128xf32> to vector<1x128xf32>
    %25 = arith.addf %0, %24 : vector<1x128xf32>
    %26 = arith.mulf %19, %19 : vector<16x128xf32>
    %cst_18 = arith.constant dense<0.000000e+00> : vector<128xf32>
    %27 = vector.multi_reduction <add>, %26, %cst_18 [0] : vector<16x128xf32> to vector<128xf32>
    %28 = vector.shape_cast %27 : vector<128xf32> to vector<1x128xf32>
    %29 = arith.addf %1, %28 : vector<1x128xf32>
    %30 = tpu.concatenate %25, %29 in 0 : vector<1x128xf32>, vector<1x128xf32> -> vector<2x128xf32>
    %c0_19 = arith.constant 0 : index
    %c0_20 = arith.constant 0 : index
    %c0_21 = arith.constant 0 : index
    %31 = vector.load %arg4[%c0_19, %c0_20, %c0_21] : memref<1x2x128xf32, #tpu.memory_space<vmem>>, vector<1x2x128xf32>
    %32 = vector.shape_cast %31 : vector<1x2x128xf32> to vector<2x128xf32>
    %33 = vector.shape_cast %30 : vector<2x128xf32> to vector<1x2x128xf32>
    tpu.vector_store %arg4[%c0_19, %c0_20, %c0_21], %33 {strides = array<i32>} : memref<1x2x128xf32, #tpu.memory_space<vmem>>, vector<1x2x128xf32>,
    return
  }
  func.func @transform_0(%arg0: i32) -> (i32, i32, i32) {
    %c0_i32 = arith.constant 0 : i32
    %c0_i32_0 = arith.constant 0 : i32
    %c0_i32_1 = arith.constant 0 : i32
    return %arg0, %c0_i32, %c0_i32_0 : i32, i32, i32
  }
  func.func @transform_1(%arg0: i32) -> (i32, i32, i32) {
    %c0_i32 = arith.constant 0 : i32
    %c0_i32_0 = arith.constant 0 : i32
    %c0_i32_1 = arith.constant 0 : i32
    %c0_i32_2 = arith.constant 0 : i32
    return %c0_i32, %c0_i32_0, %c0_i32_1 : i32, i32, i32
  }
  func.func @transform_2(%arg0: i32) -> (i32, i32, i32) {
    %c0_i32 = arith.constant 0 : i32
    %c0_i32_0 = arith.constant 0 : i32
    %c0_i32_1 = arith.constant 0 : i32
    return %arg0, %c0_i32, %c0_i32_0 : i32, i32, i32
  }
  func.func @transform_3(%arg0: i32) -> (i32, i32, i32) {
    %c0_i32 = arith.constant 0 : i32
    %c0_i32_0 = arith.constant 0 : i32
    %c0_i32_1 = arith.constant 0 : i32
    return %arg0, %c0_i32, %c0_i32_0 : i32, i32, i32
  }
}

</mosaic_0001>

<llo_original>
// kernel: tpu_custom_call.1
$region0: #{tpu_custom_call.1}
  #allocation0 [shape = 'u32[]', space=smem, size = 0x4, offset = 0x4, fixed_abs, tag = 'smem constant byte address 0x4 - core index']
  #allocation1 [shape = 'u32[144,128]{1,0:T(1,128)}', space=vmem, size = 0x12000, scoped, tag = 'internal scratch']
  %s0 = inlined_call_operand.vmem [shape: f32[2,18,72], index: 0, kind: input, shape index: {}]
  %s1 = inlined_call_operand.hbm [shape: f32[3,72,128], index: 1, kind: input, shape index: {}]
  %s2 = inlined_call_operand.hbm [shape: f32[2,16,128], index: 2, kind: output, shape index: {0}]
  %s3 = inlined_call_operand.hbm [shape: f32[2,2,128], index: 3, kind: output, shape index: {1}]
  %4 = xla_tuple %s2, %s3
  %s5 = sld [smem:[#allocation0]]
  $region53: #{tpu_custom_call.1} parent=0
    _
  %s7 = ssub.s32 1, %s5
  %s8 = scalar_select 0, %s7, %s5
  $region1: #{tpu_custom_call.1} parent=0
    #allocation2 [shape = 'u8[110592]{0}', space=vmem, size = 0x1b000, scoped, tag = 'input window, operand 1, single buffered']
    #allocation3 [shape = 's32[2]{0}', space=sflag, size = 0x8, scoped, tag = 'scoped memory for tpu_custom_call.1']
    #allocation4 [shape = 's32[2]{0}', space=sflag, size = 0x8, scoped, tag = 'scoped memory for tpu_custom_call.1']
    #allocation5 [shape = 'u8[16384]{0}', space=vmem, size = 0x4000, scoped, tag = 'output window, operand 0']
    #allocation6 [shape = 'u8[2048]{0}', space=vmem, size = 0x800, scoped, tag = 'output window, operand 1']
    #allocation7 [shape = 's32[2]{0}', space=sflag, size = 0x8, scoped, tag = 'scoped memory for tpu_custom_call.1']
    %9 = vsyncpa [#allocation3], 0
    %10 = vsyncpa [#allocation4], 0
    %s11 = scalar_lea.sflag [#allocation4], 1
    %12 = vsyncpa %s11, 0
    %13 = vsyncpa [#allocation7], 0
    %s14 = scalar_lea.sflag [#allocation7], 1
    %15 = vsyncpa %s14, 0
    loop: start=0, step=1, limit=4
    $region2: #{tpu_custom_call.1} parent=1 // loop_pre_header
      _
    $region3: #{tpu_custom_call.1} parent=1 // loop_header
      %s17 = sphi 0, %s21
      %p18 = scmp.ge.s32.totalorder %s17, 4
      %s27 = sphi 0, %s29
      %s30 = sphi 0, %s27
      %s31 = sphi 0, %s30
      %s47 = sphi 0, %s31
      %s51 = sphi 0, %s51
      %s53 = sphi 0, %s51
      %s54 = sphi 0, %s53
      %s68 = sphi 0, %s54
      %s74 = sphi 0, %s76
      %s77 = sphi 0, %s74
      %s78 = sphi 0, %s77
      %s94 = sphi 0, %s78
      %s100 = sphi 0, %s102
      %s103 = sphi 0, %s100
      %s104 = sphi 0, %s103
      %s120 = sphi 0, %s104
    $region4: #{tpu_custom_call.1} parent=1 // loop_header_branch
      %20 = sbr.rel (%p18) target = $region8
    $region5: #{tpu_custom_call.1} parent=1 // loop_body
      %s22 = ssub.s32 %s17, 1
      %s23 = ssub.s32 %s17, 2
      %s24 = sadd.s32 %s17, 1
      %s25 = ssub.s32 %s17, %s24
      %p26 = scmp.eq.s32.totalorder %s25, 0
      %s28 = sadd.s32 %s27, 1
      %s29 = scalar_select %p26, %s27, %s28
      %p32 = pneg %p26
      %p33 = scmp.eq.s32.totalorder %s17, 1
      %p34 = por %p32, %p33
      %p35 = scmp.ne.s32.totalorder %s27, %s30
      %p36 = scmp.eq.s32.totalorder %s17, 0
      %p37 = por %p35, %p36
      %p38 = scmp.ne.s32.totalorder %s27, %s30
      %p39 = scmp.eq.s32.totalorder %s22, 1
      %p40 = por %p38, %p39
      %p41 = scmp.ne.s32.totalorder %s30, %s31
      %p42 = scmp.eq.s32.totalorder %s22, 0
      %p43 = por %p41, %p42
      %p44 = scmp.ne.s32.totalorder %s30, %s31
      %p45 = scmp.eq.s32.totalorder %s23, 1
      %p46 = por %p44, %p45
      %p48 = scmp.ne.s32.totalorder %s31, %s47
      %p49 = scmp.eq.s32.totalorder %s23, 0
      %p50 = por %p48, %p49
      %s52 = sadd.s32 %s51, 1
      %p55 = scmp.eq.s32.totalorder %s17, 1
      %p56 = scmp.ne.s32.totalorder %s51, %s53
      %p57 = scmp.eq.s32.totalorder %s17, 0
      %p58 = por %p56, %p57
      %p59 = scmp.ne.s32.totalorder %s51, %s53
      %p60 = scmp.eq.s32.totalorder %s22, 1
      %p61 = por %p59, %p60
      %p62 = scmp.ne.s32.totalorder %s53, %s54
      %p63 = scmp.eq.s32.totalorder %s22, 0
      %p64 = por %p62, %p63
      %p65 = scmp.ne.s32.totalorder %s53, %s54
      %p66 = scmp.eq.s32.totalorder %s23, 1
      %p67 = por %p65, %p66
      %p69 = scmp.ne.s32.totalorder %s54, %s68
      %p70 = scmp.eq.s32.totalorder %s23, 0
      %p71 = por %p69, %p70
      %s72 = ssub.s32 %s17, %s24
      %p73 = scmp.eq.s32.totalorder %s72, 0
      %s75 = sadd.s32 %s74, 1
      %s76 = scalar_select %p73, %s74, %s75
      %p79 = pneg %p73
      %p80 = scmp.eq.s32.totalorder %s17, 1
      %p81 = por %p79, %p80
      %p82 = scmp.ne.s32.totalorder %s74, %s77
      %p83 = scmp.eq.s32.totalorder %s17, 0
      %p84 = por %p82, %p83
      %p85 = scmp.ne.s32.totalorder %s74, %s77
      %p86 = scmp.eq.s32.totalorder %s22, 1
      %p87 = por %p85, %p86
      %p88 = scmp.ne.s32.totalorder %s77, %s78
      %p89 = scmp.eq.s32.totalorder %s22, 0
      %p90 = por %p88, %p89
      %p91 = scmp.ne.s32.totalorder %s77, %s78
      %p92 = scmp.eq.s32.totalorder %s23, 1
      %p93 = por %p91, %p92
      %p95 = scmp.ne.s32.totalorder %s78, %s94
      %p96 = scmp.eq.s32.totalorder %s23, 0
      %p97 = por %p95, %p96
      %s98 = ssub.s32 %s17, %s24
      %p99 = scmp.eq.s32.totalorder %s98, 0
      %s101 = sadd.s32 %s100, 1
      %s102 = scalar_select %p99, %s100, %s101
      %p105 = pneg %p99
      %p106 = scmp.eq.s32.totalorder %s17, 1
      %p107 = por %p105, %p106
      %p108 = scmp.ne.s32.totalorder %s100, %s103
      %p109 = scmp.eq.s32.totalorder %s17, 0
      %p110 = por %p108, %p109
      %p111 = scmp.ne.s32.totalorder %s100, %s103
      %p112 = scmp.eq.s32.totalorder %s22, 1
      %p113 = por %p111, %p112
      %p114 = scmp.ne.s32.totalorder %s103, %s104
      %p115 = scmp.eq.s32.totalorder %s22, 0
      %p116 = por %p114, %p115
      %p117 = scmp.ne.s32.totalorder %s103, %s104
      %p118 = scmp.eq.s32.totalorder %s23, 1
      %p119 = por %p117, %p118
      %p121 = scmp.ne.s32.totalorder %s104, %s120
      %p122 = scmp.eq.s32.totalorder %s23, 0
      %p123 = por %p121, %p122
      %p124 = scmp.le.s32.totalorder 1, %s17
      %p125 = scmp.lt.s32.totalorder %s17, 3
      %p126 = pnand %p124, %p125
      %p127 = pneg %p126
      // Predicated region
      $region9: #{tpu_custom_call.1} parent=5 // pred_check
        _
      $region10: #{tpu_custom_call.1} parent=5 // pred_check_branch
        %129 = sbr.rel (%p126) target = $region12
      $region11: #{tpu_custom_call.1} parent=5 // pred_region
        %s130 = ssub.s32 %s17, 1
        // Predicated region
        $region13: #{tpu_custom_call.1} parent=11 // pred_check
          %p131 = pneg %p64
        $region14: #{tpu_custom_call.1} parent=11 // pred_check_branch
          %133 = sbr.rel (%p131) target = $region16
        $region15: #{tpu_custom_call.1} parent=11 // pred_region
          %s135 = ssub.s32 3456, 3456
          %136 = vsyncadd [#allocation3], %s135
          %s137 = sshll.u32 [#allocation2], 4
          %s138 = int_to_ptr.vmem [resolvable:$true] %s137
          %143 = dma.hbm_to_vmem [thread:$0]  %s1, 3456, %s138, [#allocation3], 128, 128, 8
        $region16: #{tpu_custom_call.1} parent=11 // pred_fallthru
          _
      $region12: #{tpu_custom_call.1} parent=5 // pred_fallthru
        _
      %p144 = scmp.lt.s32.totalorder %s17, 2
      // Predicated region
      $region17: #{tpu_custom_call.1} parent=5 // pred_check
        %p145 = pneg %p144
      $region18: #{tpu_custom_call.1} parent=5 // pred_check_branch
        %147 = sbr.rel (%p145) target = $region20
      $region19: #{tpu_custom_call.1} parent=5 // pred_region
        // Predicated region
        $region21: #{tpu_custom_call.1} parent=19 // pred_check
          %p148 = pneg %p37
        $region22: #{tpu_custom_call.1} parent=19 // pred_check_branch
          %150 = sbr.rel (%p148) target = $region24
        $region23: #{tpu_custom_call.1} parent=19 // pred_region
          %p151 = scmp.lt.s32.totalorder %s17, 1
          %s152 = scalar_select %p151, %s17, 1
          %s153 = smul.addr %s152, 3
          %s154 = smul.addr %s153, 8
          %s155 = scalar_lea.vmem %s0, %s154
        $region24: #{tpu_custom_call.1} parent=19 // pred_fallthru
          _
      $region20: #{tpu_custom_call.1} parent=5 // pred_fallthru
        _
      %p156 = scmp.le.s32.totalorder 1, %s17
      %p157 = scmp.lt.s32.totalorder %s17, 3
      %p158 = pnand %p156, %p157
      %p159 = pneg %p158
      // Predicated region
      $region25: #{tpu_custom_call.1} parent=5 // pred_check
        _
      $region26: #{tpu_custom_call.1} parent=5 // pred_check_branch
        %161 = sbr.rel (%p158) target = $region28
      $region27: #{tpu_custom_call.1} parent=5 // pred_region
        %s162 = ssub.s32 %s17, 1
        // Predicated region
        $region29: #{tpu_custom_call.1} parent=27 // pred_check
          %p163 = pneg %p64
        $region30: #{tpu_custom_call.1} parent=27 // pred_check_branch
          %165 = sbr.rel (%p163) target = $region32
        $region31: #{tpu_custom_call.1} parent=27 // pred_region
          %166 = dma.done [#allocation3], 3456
        $region32: #{tpu_custom_call.1} parent=27 // pred_fallthru
          _
        %p167 = scmp.lt.s32.totalorder %s22, 1
        %s168 = scalar_select %p167, %s22, 1
        %s169 = smul.addr %s168, 3
        %s170 = smul.addr %s169, 8
        %s171 = scalar_lea.vmem %s0, %s170
        %p172 = pneg %p43
        %p173 = pneg %p40
        %p174 = pneg %p64
        %p175 = pneg %p61
        %p176 = pneg %p90
        %p177 = pneg %p87
        %s178 = sand.u32 %s77, 1
        %s179 = scalar_lea.sflag [#allocation4], %s178
        %s180 = sand.u32 %s77, 1
        %s181 = smul.addr %s180, 16
        %s182 = scalar_lea.vmem [#allocation5], %s181
        %p183 = pneg %p116
        %p184 = pneg %p113
        %s185 = sand.u32 %s103, 1
        %s186 = scalar_lea.sflag [#allocation7], %s185
        %s187 = sand.u32 %s103, 1
        %s188 = smul.addr %s187, 2
        %s189 = scalar_lea.vmem [#allocation6], %s188
        %p190 = scmp.lt.s32.totalorder %s22, 1
        %s191 = scalar_select %p190, %s22, 1
        %s192 = smul.addr %s191, 3
        %s193 = smul.addr %s192, 8
        %s194 = scalar_lea.vmem %s0, %s193
        %v195 = vld [vmem:[%s194] sm:$0xff]
        %v196 = vld [vmem:[%s194 + $0x8] sm:$0xff]
        %v197 = vld [vmem:[%s194 + $0x10] sm:$0x3]
        %v198 = vld [vmem:[#allocation2] sm:$0xff]
        %v199 = vld [vmem:[#allocation2 + $0x8] sm:$0xff]
        %v200 = vld [vmem:[#allocation2 + $0x10] sm:$0xff]
        %v201 = vld [vmem:[#allocation2 + $0x18] sm:$0xff]
        %v202 = vld [vmem:[#allocation2 + $0x20] sm:$0xff]
        %v203 = vld [vmem:[#allocation2 + $0x28] sm:$0xff]
        %v204 = vld [vmem:[#allocation2 + $0x30] sm:$0xff]
        %v205 = vld [vmem:[#allocation2 + $0x38] sm:$0xff]
        %v206 = vld [vmem:[#allocation2 + $0x40] sm:$0xff]
        %s207 = scalar_lea.vmem [#allocation2], 72
        %v208 = vld [vmem:[%s207] sm:$0xff]
        %v209 = vld [vmem:[%s207 + $0x8] sm:$0xff]
        %v210 = vld [vmem:[%s207 + $0x10] sm:$0xff]
        %v211 = vld [vmem:[%s207 + $0x18] sm:$0xff]
        %v212 = vld [vmem:[%s207 + $0x20] sm:$0xff]
        %v213 = vld [vmem:[%s207 + $0x28] sm:$0xff]
        %v214 = vld [vmem:[%s207 + $0x30] sm:$0xff]
        %v215 = vld [vmem:[%s207 + $0x38] sm:$0xff]
        %v216 = vld [vmem:[%s207 + $0x40] sm:$0xff]
        %vm220 = vcmask 1046528
        %v221 = vrot.slane %v195, 1
        %v222 = vrot.slane %v196, 1
        %v223 = vsel %vm220, %v221, %v222
        %v224 = vrot.slane %v197, 1
        %v225 = vsel %vm220, %v222, %v224
        %vm226 = vcmask 588800
        %v227 = vsel %vm226, %v223, 0
        %v229 = vsel %vm226, %v225, 0
        %231 = vmatprep.subr.mxu0 0.0
        %232 = vmatpush1.msra.mxu0 %v208
        %233 = vmatprep.subr.mxu0 0.0
        %234 = vmatpush1.msra.mxu0 %v209
        %235 = vmatprep.subr.mxu0 0.0
        %236 = vmatpush1.msra.mxu0 %v210
        %237 = vmatprep.subr.mxu0 0.0
        %238 = vmatpush1.msra.mxu0 %v211
        %239 = vmatprep.subr.mxu0 0.0
        %240 = vmatpush1.msra.mxu0 %v212
        %241 = vmatprep.subr.mxu0 0.0
        %242 = vmatpush1.msra.mxu0 %v213
        %243 = vmatprep.subr.mxu0 0.0
        %244 = vmatpush1.msra.mxu0 %v214
        %245 = vmatprep.subr.mxu0 0.0
        %246 = vmatpush1.msra.mxu0 %v215
        %247 = vmatprep.subr.mxu0 0.0
        %248 = vmatpush1.msra.mxu0 %v216
        %249 = vmatprep.subr.mxu0 0.0
        %250 = vmatpush1.msra.mxu0 0.0
        %251 = vmatprep.subr.mxu0 0.0
        %252 = vmatpush1.msra.mxu0 0.0
        %253 = vmatprep.subr.mxu0 0.0
        %254 = vmatpush1.msra.mxu0 0.0
        %255 = vmatprep.subr.mxu0 0.0
        %256 = vmatpush1.msra.mxu0 0.0
        %257 = vmatprep.subr.mxu0 0.0
        %258 = vmatpush1.msra.mxu0 0.0
        %259 = vmatprep.subr.mxu0 0.0
        %260 = vmatpush1.msra.mxu0 0.0
        %261 = vmatprep.subr.mxu0 0.0
        %262 = vmatpush1.msra.mxu0 0.0
        %263 = vmatprep.subr.mxu0 0.0
        %264 = vmatpush1.msra.mxu0 0.0
        %265 = vmatprep.subr.mxu0 0.0
        %266 = vmatpush1.msra.mxu0 0.0
        %267 = vmatprep.subr.mxu0 0.0
        %268 = vmatpush1.msra.mxu0 0.0
        %269 = vmatprep.subr.mxu0 0.0
        %270 = vmatpush1.msra.mxu0 0.0
        %271 = vmatprep.subr.mxu0 0.0
        %272 = vmatpush1.msra.mxu0 0.0
        %273 = vmatprep.subr.mxu0 0.0
        %274 = vmatpush1.msra.mxu0 0.0
        %275 = vmatprep.subr.mxu0 0.0
        %276 = vmatpush1.msra.mxu0 0.0
        %277 = vmatprep.subr.mxu0 0.0
        %278 = vmatpush1.msra.mxu0 0.0
        %279 = vmatprep.subr.mxu0 0.0
        %280 = vmatpush1.msra.mxu0 0.0
        %281 = vmatprep.subr.mxu0 0.0
        %282 = vmatpush1.msra.mxu0 0.0
        %283 = vmatprep.subr.mxu0 0.0
        %284 = vmatpush1.msra.mxu0 0.0
        %285 = vmatprep.subr.mxu0 0.0
        %286 = vmatpush1.msra.mxu0 0.0
        %287 = vmatprep.subr.mxu0 0.0
        %288 = vmatpush1.msra.mxu0 0.0
        %289 = vmatprep.subr.mxu0 0.0
        %290 = vmatpush1.msra.mxu0 0.0
        %291 = vmatprep.subr.mxu0 0.0
        %292 = vmatpush1.msra.mxu0 0.0
        %293 = vmatprep.subr.mxu0 0.0
        %294 = vmatpush1.msra.mxu0 0.0
        %295 = vmatprep.mubr.f32.mxu0 0.0
        %296 = vmatmul.mubr.f32.gmra.mrb[0].mxu0 %v227
        %v297 = vpop.f32.mrb[0].mxu0
        %v298 = vadd.f32 0.0, %v297
        %v299 = vpop.f32.mrb[0].mxu0
        %300 = vmatprep.mubr.f32.mxu0 0.0
        %301 = vmatmul.mubr.f32.gmra.mrb[0].mxu0 %v229
        %v302 = vpop.f32.mrb[0].mxu0
        %v303 = vadd.f32 0.0, %v302
        %v304 = vpop.f32.mrb[0].mxu0
        %305 = vdwg.mxu0
        %v306 = vsel %vm226, %v195, 0
        %v308 = vsel %vm226, %v196, 0
        %310 = vmatprep.subr.mxu0 0.0
        %311 = vmatpush1.msra.mxu0 %v198
        %312 = vmatprep.subr.mxu0 0.0
        %313 = vmatpush1.msra.mxu0 %v199
        %314 = vmatprep.subr.mxu0 0.0
        %315 = vmatpush1.msra.mxu0 %v200
        %316 = vmatprep.subr.mxu0 0.0
        %317 = vmatpush1.msra.mxu0 %v201
        %318 = vmatprep.subr.mxu0 0.0
        %319 = vmatpush1.msra.mxu0 %v202
        %320 = vmatprep.subr.mxu0 0.0
        %321 = vmatpush1.msra.mxu0 %v203
        %322 = vmatprep.subr.mxu0 0.0
        %323 = vmatpush1.msra.mxu0 %v204
        %324 = vmatprep.subr.mxu0 0.0
        %325 = vmatpush1.msra.mxu0 %v205
        %326 = vmatprep.subr.mxu0 0.0
        %327 = vmatpush1.msra.mxu0 %v206
        %328 = vmatprep.subr.mxu0 0.0
        %329 = vmatpush1.msra.mxu0 0.0
        %330 = vmatprep.subr.mxu0 0.0
        %331 = vmatpush1.msra.mxu0 0.0
        %332 = vmatprep.subr.mxu0 0.0
        %333 = vmatpush1.msra.mxu0 0.0
        %334 = vmatprep.subr.mxu0 0.0
        %335 = vmatpush1.msra.mxu0 0.0
        %336 = vmatprep.subr.mxu0 0.0
        %337 = vmatpush1.msra.mxu0 0.0
        %338 = vmatprep.subr.mxu0 0.0
        %339 = vmatpush1.msra.mxu0 0.0
        %340 = vmatprep.subr.mxu0 0.0
        %341 = vmatpush1.msra.mxu0 0.0
        %342 = vmatprep.subr.mxu0 0.0
        %343 = vmatpush1.msra.mxu0 0.0
        %344 = vmatprep.subr.mxu0 0.0
        %345 = vmatpush1.msra.mxu0 0.0
        %346 = vmatprep.subr.mxu0 0.0
        %347 = vmatpush1.msra.mxu0 0.0
        %348 = vmatprep.subr.mxu0 0.0
        %349 = vmatpush1.msra.mxu0 0.0
        %350 = vmatprep.subr.mxu0 0.0
        %351 = vmatpush1.msra.mxu0 0.0
        %352 = vmatprep.subr.mxu0 0.0
        %353 = vmatpush1.msra.mxu0 0.0
        %354 = vmatprep.subr.mxu0 0.0
        %355 = vmatpush1.msra.mxu0 0.0
        %356 = vmatprep.subr.mxu0 0.0
        %357 = vmatpush1.msra.mxu0 0.0
        %358 = vmatprep.subr.mxu0 0.0
        %359 = vmatpush1.msra.mxu0 0.0
        %360 = vmatprep.subr.mxu0 0.0
        %361 = vmatpush1.msra.mxu0 0.0
        %362 = vmatprep.subr.mxu0 0.0
        %363 = vmatpush1.msra.mxu0 0.0
        %364 = vmatprep.subr.mxu0 0.0
        %365 = vmatpush1.msra.mxu0 0.0
        %366 = vmatprep.subr.mxu0 0.0
        %367 = vmatpush1.msra.mxu0 0.0
        %368 = vmatprep.subr.mxu0 0.0
        %369 = vmatpush1.msra.mxu0 0.0
        %370 = vmatprep.subr.mxu0 0.0
        %371 = vmatpush1.msra.mxu0 0.0
        %372 = vmatprep.subr.mxu0 0.0
        %373 = vmatpush1.msra.mxu0 0.0
        %374 = vmatprep.mubr.f32.mxu0 0.0
        %375 = vmatmul.mubr.f32.gmra.mrb[0].mxu0 %v306
        %v376 = vpop.f32.mrb[0].mxu0
        %v377 = vadd.f32 %v298, %v376
        %v378 = vpop.f32.mrb[0].mxu0
        %379 = vmatprep.mubr.f32.mxu0 0.0
        %380 = vmatmul.mubr.f32.gmra.mrb[0].mxu0 %v308
        %v381 = vpop.f32.mrb[0].mxu0
        %v382 = vadd.f32 %v303, %v381
        %v383 = vpop.f32.mrb[0].mxu0
        %384 = vdwg.mxu0
        %s385 = scalar_lea.vmem [#allocation2], 144
        %v386 = vld [vmem:[%s385] sm:$0xff]
        %v387 = vld [vmem:[%s385 + $0x8] sm:$0xff]
        %v388 = vld [vmem:[%s385 + $0x10] sm:$0xff]
        %v389 = vld [vmem:[%s385 + $0x18] sm:$0xff]
        %v390 = vld [vmem:[%s385 + $0x20] sm:$0xff]
        %v391 = vld [vmem:[%s385 + $0x28] sm:$0xff]
        %v392 = vld [vmem:[%s385 + $0x30] sm:$0xff]
        %v393 = vld [vmem:[%s385 + $0x38] sm:$0xff]
        %v394 = vld [vmem:[%s385 + $0x40] sm:$0xff]
        %vm395 = vcmask 1045504
        %v396 = vrot.slane %v195, 2
        %v397 = vrot.slane %v196, 2
        %v398 = vsel %vm395, %v396, %v397
        %v399 = vrot.slane %v197, 2
        %v400 = vsel %vm395, %v397, %v399
        %v401 = vsel %vm226, %v398, 0
        %v403 = vsel %vm226, %v400, 0
        %405 = vmatprep.subr.mxu0 0.0
        %406 = vmatpush1.msra.mxu0 %v386
        %407 = vmatprep.subr.mxu0 0.0
        %408 = vmatpush1.msra.mxu0 %v387
        %409 = vmatprep.subr.mxu0 0.0
        %410 = vmatpush1.msra.mxu0 %v388
        %411 = vmatprep.subr.mxu0 0.0
        %412 = vmatpush1.msra.mxu0 %v389
        %413 = vmatprep.subr.mxu0 0.0
        %414 = vmatpush1.msra.mxu0 %v390
        %415 = vmatprep.subr.mxu0 0.0
        %416 = vmatpush1.msra.mxu0 %v391
        %417 = vmatprep.subr.mxu0 0.0
        %418 = vmatpush1.msra.mxu0 %v392
        %419 = vmatprep.subr.mxu0 0.0
        %420 = vmatpush1.msra.mxu0 %v393
        %421 = vmatprep.subr.mxu0 0.0
        %422 = vmatpush1.msra.mxu0 %v394
        %423 = vmatprep.subr.mxu0 0.0
        %424 = vmatpush1.msra.mxu0 0.0
        %425 = vmatprep.subr.mxu0 0.0
        %426 = vmatpush1.msra.mxu0 0.0
        %427 = vmatprep.subr.mxu0 0.0
        %428 = vmatpush1.msra.mxu0 0.0
        %429 = vmatprep.subr.mxu0 0.0
        %430 = vmatpush1.msra.mxu0 0.0
        %431 = vmatprep.subr.mxu0 0.0
        %432 = vmatpush1.msra.mxu0 0.0
        %433 = vmatprep.subr.mxu0 0.0
        %434 = vmatpush1.msra.mxu0 0.0
        %435 = vmatprep.subr.mxu0 0.0
        %436 = vmatpush1.msra.mxu0 0.0
        %437 = vmatprep.subr.mxu0 0.0
        %438 = vmatpush1.msra.mxu0 0.0
        %439 = vmatprep.subr.mxu0 0.0
        %440 = vmatpush1.msra.mxu0 0.0
        %441 = vmatprep.subr.mxu0 0.0
        %442 = vmatpush1.msra.mxu0 0.0
        %443 = vmatprep.subr.mxu0 0.0
        %444 = vmatpush1.msra.mxu0 0.0
        %445 = vmatprep.subr.mxu0 0.0
        %446 = vmatpush1.msra.mxu0 0.0
        %447 = vmatprep.subr.mxu0 0.0
        %448 = vmatpush1.msra.mxu0 0.0
        %449 = vmatprep.subr.mxu0 0.0
        %450 = vmatpush1.msra.mxu0 0.0
        %451 = vmatprep.subr.mxu0 0.0
        %452 = vmatpush1.msra.mxu0 0.0
        %453 = vmatprep.subr.mxu0 0.0
        %454 = vmatpush1.msra.mxu0 0.0
        %455 = vmatprep.subr.mxu0 0.0
        %456 = vmatpush1.msra.mxu0 0.0
        %457 = vmatprep.subr.mxu0 0.0
        %458 = vmatpush1.msra.mxu0 0.0
        %459 = vmatprep.subr.mxu0 0.0
        %460 = vmatpush1.msra.mxu0 0.0
        %461 = vmatprep.subr.mxu0 0.0
        %462 = vmatpush1.msra.mxu0 0.0
        %463 = vmatprep.subr.mxu0 0.0
        %464 = vmatpush1.msra.mxu0 0.0
        %465 = vmatprep.subr.mxu0 0.0
        %466 = vmatpush1.msra.mxu0 0.0
        %467 = vmatprep.subr.mxu0 0.0
        %468 = vmatpush1.msra.mxu0 0.0
        %469 = vmatprep.mubr.f32.mxu0 0.0
        %470 = vmatmul.mubr.f32.gmra.mrb[0].mxu0 %v401
        %v471 = vpop.f32.mrb[0].mxu0
        %v472 = vadd.f32 0.0, %v471
        %v473 = vpop.f32.mrb[0].mxu0
        %474 = vmatprep.mubr.f32.mxu0 0.0
        %475 = vmatmul.mubr.f32.gmra.mrb[0].mxu0 %v403
        %v476 = vpop.f32.mrb[0].mxu0
        %v477 = vadd.f32 0.0, %v476
        %v478 = vpop.f32.mrb[0].mxu0
        %479 = vdwg.mxu0
        %v480 = vadd.f32 %v377, %v472
        %v481 = vadd.f32 %v382, %v477
        %482 = vst [vmem:[%s182] sm:$0xff] %v480
        %483 = vst [vmem:[%s182 + $0x8] sm:$0xff] %v481
        %v484 = vadd.f32 %v480, %v481
        %v485 = vrot.slane %v484, 4
        %v486 = vadd.f32 %v484, %v485
        %v487 = vrot.slane %v486, 2
        %v488 = vadd.f32 %v486, %v487
        %v489 = vrot.slane %v488, 1
        %v490 = vadd.f32 %v488, %v489
        %v491 = vadd.f32 %v490, 0.0
        %v492 = vmul.f32 %v480, %v480
        %v493 = vmul.f32 %v481, %v481
        %v494 = vadd.f32 %v492, %v493
        %v495 = vrot.slane %v494, 4
        %v496 = vadd.f32 %v494, %v495
        %v497 = vrot.slane %v496, 2
        %v498 = vadd.f32 %v496, %v497
        %v499 = vrot.slane %v498, 1
        %v500 = vadd.f32 %v498, %v499
        %v501 = vadd.f32 %v500, 0.0
        %vm502 = vcmask 1040384
        %v503 = vsel %vm502, %v491, %v501
        %504 = vst [vmem:[%s189] sm:$0x3] %v503
        %s505 = sand.u32 %s77, 1
        %s506 = scalar_lea.sflag [#allocation4], %s505
        %s507 = sand.u32 %s77, 1
        %s508 = smul.addr %s507, 16
        %s509 = scalar_lea.vmem [#allocation5], %s508
        %s510 = sand.u32 %s103, 1
        %s511 = scalar_lea.sflag [#allocation7], %s510
        %s512 = sand.u32 %s103, 1
        %s513 = smul.addr %s512, 2
        %s514 = scalar_lea.vmem [#allocation6], %s513
        // Predicated region
        $region33: #{tpu_custom_call.1} parent=27 // pred_check
          %p515 = pneg %p87
        $region34: #{tpu_custom_call.1} parent=27 // pred_check_branch
          %517 = sbr.rel (%p515) target = $region36
        $region35: #{tpu_custom_call.1} parent=27 // pred_region
          %s519 = ssub.s32 256, 256
          %520 = vsyncadd %s506, %s519
          %s521 = smul.addr %s22, 2
          %s522 = smul.addr %s521, 128
          %s523 = scalar_lea.hbm %s2, %s522
          %s524 = sshll.u32 %s509, 4
          %s525 = int_to_ptr.vmem [resolvable:$true] %s524
          %530 = dma.vmem_to_hbm [thread:$0]  %s525, 256, %s523, %s506, 128, 128, 8
        $region36: #{tpu_custom_call.1} parent=27 // pred_fallthru
          _
        // Predicated region
        $region37: #{tpu_custom_call.1} parent=27 // pred_check
          %p531 = pneg %p113
        $region38: #{tpu_custom_call.1} parent=27 // pred_check_branch
          %533 = sbr.rel (%p531) target = $region40
        $region39: #{tpu_custom_call.1} parent=27 // pred_region
          %s535 = ssub.s32 32, 32
          %536 = vsyncadd %s511, %s535
          %s537 = smul.addr %s22, 32
          %s538 = scalar_lea.hbm %s3, %s537
          %s540 = sshll.u32 %s514, 4
          %s541 = int_to_ptr.vmem [resolvable:$true] %s540
          %543 = dma.vmem_to_hbm [thread:$0]  %s541, 32, %s538, %s511
        $region40: #{tpu_custom_call.1} parent=27 // pred_fallthru
          _
      $region28: #{tpu_custom_call.1} parent=5 // pred_fallthru
        _
      %p544 = scmp.le.s32.totalorder 2, %s17
      // Predicated region
      $region41: #{tpu_custom_call.1} parent=5 // pred_check
        %p545 = pneg %p544
      $region42: #{tpu_custom_call.1} parent=5 // pred_check_branch
        %547 = sbr.rel (%p545) target = $region44
      $region43: #{tpu_custom_call.1} parent=5 // pred_region
        %s548 = ssub.s32 %s17, 2
        // Predicated region
        $region45: #{tpu_custom_call.1} parent=43 // pred_check
          %p549 = pneg %p93
        $region46: #{tpu_custom_call.1} parent=43 // pred_check_branch
          %551 = sbr.rel (%p549) target = $region48
        $region47: #{tpu_custom_call.1} parent=43 // pred_region
          %s552 = sand.u32 %s78, 1
          %s553 = scalar_lea.sflag [#allocation4], %s552
          %s554 = sand.u32 %s78, 1
          %s555 = smul.addr %s554, 16
          %s556 = scalar_lea.vmem [#allocation5], %s555
          %557 = dma.done %s553, 256
        $region48: #{tpu_custom_call.1} parent=43 // pred_fallthru
          _
        // Predicated region
        $region49: #{tpu_custom_call.1} parent=43 // pred_check
          %p558 = pneg %p119
        $region50: #{tpu_custom_call.1} parent=43 // pred_check_branch
          %560 = sbr.rel (%p558) target = $region52
        $region51: #{tpu_custom_call.1} parent=43 // pred_region
          %s561 = sand.u32 %s104, 1
          %s562 = scalar_lea.sflag [#allocation7], %s561
          %s563 = sand.u32 %s104, 1
          %s564 = smul.addr %s563, 2
          %s565 = scalar_lea.vmem [#allocation6], %s564
          %566 = dma.done %s562, 32
        $region52: #{tpu_custom_call.1} parent=43 // pred_fallthru
          _
      $region44: #{tpu_custom_call.1} parent=5 // pred_fallthru
        _
    $region6: #{tpu_custom_call.1} parent=1 // loop_footer
      %s21 = sadd.s32 1, %s17
    $region7: #{tpu_custom_call.1} parent=1 // loop_footer_branch
      %16 = sbr.rel target = $region3
    $region8: #{tpu_custom_call.1} parent=1 // loop_exit
      _
    %567 = vsyncpa [#allocation3], 1
    %s568 = scalar_lea.sflag [#allocation3], 1
    %569 = vsyncpa %s568, 1
    %570 = vsyncpa [#allocation4], 1
    %s571 = scalar_lea.sflag [#allocation4], 1
    %572 = vsyncpa %s571, 1
    %573 = vsyncpa [#allocation7], 1
    %s574 = scalar_lea.sflag [#allocation7], 1
    %575 = vsyncpa %s574, 1

</llo_original>
